<compile_context>
chip_gen: v6e
topology: v6e:2x2x1
jax: 0.10.0
libtpu: 0.0.40
codegen_flags: <defaults>
</compile_context>

<pallas_src>
import functools

import numpy as np
import jax
import jax.numpy as jnp
from jax.experimental import pallas as pl
from jax.experimental.pallas import tpu as pltpu


_NEG_LARGE = -1e30  # finite "-inf" for the running max (avoids inf-inf NaNs)


def _round_up(x, m):
    return (x + m - 1) // m * m


# ----------------------------- Pallas kernel ------------------------------- #
def _infonce_kernel(anc_ref, emb_ref, anci_ref, posi_ref, ovr_ref, loss_ref,
                    m_sc, l_sc, p_sc, *, inv_temp, tp, tn, n_valid, p_valid,
                    use_margin):
    i = pl.program_id(0)          # P-tile index   ("parallel")
    j = pl.program_id(1)          # N-tile index   ("arbitrary", online softmax)

    @pl.when(j == 0)
    def _init():
        m_sc[...] = jnp.full(m_sc.shape, _NEG_LARGE, jnp.float32)
        l_sc[...] = jnp.zeros_like(l_sc)
        p_sc[...] = jnp.zeros_like(p_sc)

    # (TP, D) x (TN, D)^T -> (TP, TN); bf16 operands, f32 accumulate on the MXU.
    sim = jax.lax.dot_general(anc_ref[...], emb_ref[...],
                              (((1,), (1,)), ((), ())),
                              preferred_element_type=jnp.float32)

    col = j * tn + jax.lax.broadcasted_iota(jnp.int32, (tp, tn), 1)
    anci = anci_ref[...]          # (TP, 1) int32: anchor's own column per row
    posi = posi_ref[...]          # (TP, 1) int32: positive column per row
    pos = col == posi             # one-hot of the positive column (if in tile)

    # mask_same (-inf at the anchor's own column) + padded (>= N) columns.
    invalid = jnp.logical_or(col == anci, col >= n_valid)
    sim = jnp.where(invalid, -jnp.inf, sim)

    if use_margin:
        # positive logit replaced with cos(arccos(clamp(sim,0,1)) + margin),
        # precomputed per pair in f32 by the wrapper.
        sim = jnp.where(pos, ovr_ref[...], sim)

    s = sim * inv_temp            # temperature folded into a static multiply

    # online log-sum-exp over the N axis
    m_prev = m_sc[...]
    m_new = jnp.maximum(m_prev, jnp.max(s, axis=-1, keepdims=True))
    alpha = jnp.exp(m_prev - m_new)
    l_sc[...] = alpha * l_sc[...] + jnp.sum(jnp.exp(s - m_new),
                                            axis=-1, keepdims=True)
    # carry the (scaled) positive logit; matches exactly once across N tiles.
    p_sc[...] = p_sc[...] + jnp.sum(jnp.where(pos, s, 0.0),
                                    axis=-1, keepdims=True)
    m_sc[...] = m_new

    @pl.when(j == pl.num_programs(1) - 1)
    def _finalize():
        row = i * tp + jax.lax.broadcasted_iota(jnp.int32, (tp, 1), 0)
        valid = (row < p_valid).astype(jnp.float32)   # drop padded pair rows
        lse = m_sc[...] + jnp.log(l_sc[...])
        loss_ref[...] = (lse - p_sc[...]) * valid     # -log_softmax at positive


# ------------------------------ JAX wrapper -------------------------------- #
def infonce_loss(embeddings, positive_pairs, *, temperature,
                 angular_margin=0.0, eps=1e-8, tp=128, tn=512):
    # TODO(synk): reference forward calls self.project(embeddings); `project`
    # is not defined in the given module, so it is treated as identity here.
    # TODO(synk): anchors with identical indices could be deduped (exact only
    # for angular_margin == 0); not done here to keep pair semantics general.
    N, D = embeddings.shape
    P = positive_pairs.shape[0]

    # Normalize once in the wrapper (mem-bound, XLA-fused); the kernel sees
    # pre-normalized rows, so per-tile renormalization is never repeated.
    e_f32 = embeddings.astype(jnp.float32)
    norm = jnp.sqrt(jnp.sum(e_f32 * e_f32, axis=-1, keepdims=True))
    e_n = e_f32 / jnp.maximum(norm, eps)

    anc = positive_pairs[:, 0].astype(jnp.int32)
    pos = positive_pairs[:, 1].astype(jnp.int32)

    # bf16 MXU operands; anchors are rows of the normalized table (bf16 gather
    # halves the extra HBM traffic of the anchor materialization).
    e_bf16 = e_n.astype(jnp.bfloat16)
    a_bf16 = e_bf16[anc]

    use_margin = float(angular_margin) > 0.0
    if use_margin:
        pos_sim = jnp.sum(e_n[anc] * e_n[pos], axis=-1)            # (P,)
        ovr = jnp.cos(jnp.arccos(jnp.clip(pos_sim, 0.0, 1.0))
                      + float(angular_margin)).astype(jnp.float32)
    else:
        ovr = jnp.zeros((P,), jnp.float32)                         # unused

    # Tile sizes (clamped for tiny problems; sublane/lane aligned).
    tp = min(tp, _round_up(P, 8))
    tn = min(tn, _round_up(N, 128))
    p_pad = _round_up(P, tp)
    n_pad = _round_up(N, tn)

    a_bf16 = jnp.pad(a_bf16, ((0, p_pad - P), (0, 0)))
    e_bf16 = jnp.pad(e_bf16, ((0, n_pad - N), (0, 0)))
    anc_idx = jnp.pad(anc, (0, p_pad - P), constant_values=-1).reshape(p_pad, 1)
    pos_idx = jnp.pad(pos, (0, p_pad - P), constant_values=-1).reshape(p_pad, 1)
    ovr = jnp.pad(ovr, (0, p_pad - P)).reshape(p_pad, 1)

    grid = (p_pad // tp, n_pad // tn)
    kernel = functools.partial(
        _infonce_kernel, inv_temp=1.0 / float(temperature), tp=tp, tn=tn,
        n_valid=N, p_valid=P, use_margin=use_margin)

    row_loss = pl.pallas_call(
        kernel,
        out_shape=jax.ShapeDtypeStruct((p_pad, 1), jnp.float32),
        grid=grid,
        in_specs=[
            pl.BlockSpec((tp, D), lambda i, j: (i, 0)),   # anchors (bf16)
            pl.BlockSpec((tn, D), lambda i, j: (j, 0)),   # embeddings (bf16)
            pl.BlockSpec((tp, 1), lambda i, j: (i, 0)),   # anchor column idx
            pl.BlockSpec((tp, 1), lambda i, j: (i, 0)),   # positive column idx
            pl.BlockSpec((tp, 1), lambda i, j: (i, 0)),   # margin override
        ],
        out_specs=pl.BlockSpec((tp, 1), lambda i, j: (i, 0)),
        scratch_shapes=[pltpu.VMEM((tp, 1), jnp.float32)] * 3,  # m, l, pos-logit
        compiler_params=pltpu.CompilerParams(
            dimension_semantics=("parallel", "arbitrary"),
            vmem_limit_bytes=32 * 1024 * 1024),
    )(a_bf16, e_bf16, anc_idx, pos_idx, ovr)

    return jnp.sum(row_loss)


# ----------------------- pair selector (host-side glue) -------------------- #
def same_label_pairs(labels):
    """All ordered pairs (i, j), i != j, labels[i] == labels[j]."""
    labels = np.asarray(labels)
    n = labels.shape[0]
    ii, jj = np.meshgrid(np.arange(n), np.arange(n), indexing="ij")
    keep = (labels[ii] == labels[jj]) & (ii != jj)
    return np.stack([ii[keep], jj[keep]], axis=1).astype(np.int32)


# -------------------------- pure-JAX reference ----------------------------- #
def _reference(embeddings, pairs, temperature, angular_margin=0.0, eps=1e-8):
    e = embeddings.astype(jnp.float32)
    e_n = e / jnp.maximum(jnp.linalg.norm(e, axis=-1, keepdims=True), eps)
    sim = e_n[pairs[:, 0]] @ e_n.T
    rows = jnp.arange(pairs.shape[0])
    sim = sim.at[rows, pairs[:, 0]].add(-jnp.inf)
    if angular_margin > 0.0:
        t = jnp.clip(sim[rows, pairs[:, 1]], 0.0, 1.0)
        t = jnp.cos(jnp.arccos(t) + angular_margin)
        sim = sim.at[rows, pairs[:, 1]].set(t)
    sim = sim / temperature
    lsm = -jax.nn.log_softmax(sim, axis=-1)
    return jnp.take_along_axis(lsm, pairs[:, 1:2], axis=1).sum()


if __name__ == "__main__":
    key = jax.random.PRNGKey(0)
    N, D = 8, 32                       # 8 samples, 32-dim embeddings
    temperature = 0.1

    embeddings = jax.random.normal(key, (N, D), dtype=jnp.float32)
    target = np.array([0, 0, 0, 0, 1, 1, 1, 1], dtype=np.int32)
    pairs = jnp.asarray(same_label_pairs(target))      # (24, 2) positive pairs

    # angular_margin = 0 path
    loss = jax.block_until_ready(
        infonce_loss(embeddings, pairs, temperature=temperature))
    ref = _reference(embeddings, pairs, temperature)
    # bf16 MXU operands => looser tolerance than the old f32-everything kernel.
    assert jnp.allclose(loss, ref, rtol=5e-2, atol=5e-1), (loss, ref)

    # angular_margin > 0 path
    loss_m = jax.block_until_ready(
        infonce_loss(embeddings, pairs, temperature=temperature,
                     angular_margin=0.2))
    ref_m = _reference(embeddings, pairs, temperature, angular_margin=0.2)
    assert jnp.allclose(loss_m, ref_m, rtol=5e-2, atol=5e-1), (loss_m, ref_m)

    print("KERNEL_OK")
</pallas_src>

<mosaic_0001>
module attributes {stable_mosaic.version = 11 : i64} {
  func.func @_infonce_kernel(%arg0: i32, %arg1: i32, %arg2: memref<24x32xbf16, #tpu.memory_space<vmem>>, %arg3: memref<128x32xbf16, #tpu.memory_space<vmem>>, %arg4: memref<24x1xi32, #tpu.memory_space<vmem>>, %arg5: memref<24x1xi32, #tpu.memory_space<vmem>>, %arg6: memref<24x1xf32, #tpu.memory_space<vmem>>, %arg7: memref<24x1xf32, #tpu.memory_space<vmem>>, %arg8: memref<24x1xf32, #tpu.memory_space<vmem>>, %arg9: memref<24x1xf32, #tpu.memory_space<vmem>>, %arg10: memref<24x1xf32, #tpu.memory_space<vmem>>) attributes {dimension_semantics = [#tpu.dimension_semantics<parallel>, #tpu.dimension_semantics<arbitrary>], iteration_bounds = array<i64: 1, 1>, scalar_prefetch = 0 : i64, scratch_operands = 3 : i64, tpu.core_type = #tpu.core_type<tc>, window_params = [{transform_indices = @transform_0, window_bounds = array<i64: 24, 32>}, {transform_indices = @transform_1, window_bounds = array<i64: 128, 32>}, {transform_indices = @transform_2, window_bounds = array<i64: 24, 1>}, {transform_indices = @transform_3, window_bounds = array<i64: 24, 1>}, {transform_indices = @transform_4, window_bounds = array<i64: 24, 1>}, {transform_indices = @transform_5, window_bounds = array<i64: 24, 1>}]} {
    %c0_i32 = arith.constant 0 : i32
    %0 = arith.cmpi eq, %arg1, %c0_i32 : i32
    %1 = arith.extui %0 : i1 to i32
    %c0_i32_0 = arith.constant 0 : i32
    %2 = arith.cmpi ne, %1, %c0_i32_0 : i32
    scf.if %2 {
      %cst_28 = arith.constant -1.000000e+30 : f32
      %49 = vector.broadcast %cst_28 : f32 to vector<24x1xf32>
      %c0_29 = arith.constant 0 : index
      %c0_30 = arith.constant 0 : index
      %50 = vector.load %arg8[%c0_29, %c0_30] : memref<24x1xf32, #tpu.memory_space<vmem>>, vector<24x1xf32>
      tpu.vector_store %arg8[%c0_29, %c0_30], %49 {strides = array<i32>} : memref<24x1xf32, #tpu.memory_space<vmem>>, vector<24x1xf32>,
      %cst_31 = arith.constant 0.000000e+00 : f32
      %51 = vector.broadcast %cst_31 : f32 to vector<24x1xf32>
      %c0_32 = arith.constant 0 : index
      %c0_33 = arith.constant 0 : index
      %52 = vector.load %arg9[%c0_32, %c0_33] : memref<24x1xf32, #tpu.memory_space<vmem>>, vector<24x1xf32>
      tpu.vector_store %arg9[%c0_32, %c0_33], %51 {strides = array<i32>} : memref<24x1xf32, #tpu.memory_space<vmem>>, vector<24x1xf32>,
      %cst_34 = arith.constant 0.000000e+00 : f32
      %53 = vector.broadcast %cst_34 : f32 to vector<24x1xf32>
      %c0_35 = arith.constant 0 : index
      %c0_36 = arith.constant 0 : index
      %54 = vector.load %arg10[%c0_35, %c0_36] : memref<24x1xf32, #tpu.memory_space<vmem>>, vector<24x1xf32>
      tpu.vector_store %arg10[%c0_35, %c0_36], %53 {strides = array<i32>} : memref<24x1xf32, #tpu.memory_space<vmem>>, vector<24x1xf32>,
    } else {
    }
    %c0 = arith.constant 0 : index
    %c0_1 = arith.constant 0 : index
    %3 = vector.load %arg2[%c0, %c0_1] : memref<24x32xbf16, #tpu.memory_space<vmem>>, vector<24x32xbf16>
    %c0_2 = arith.constant 0 : index
    %c0_3 = arith.constant 0 : index
    %4 = vector.load %arg3[%c0_2, %c0_3] : memref<128x32xbf16, #tpu.memory_space<vmem>>, vector<128x32xbf16>
    %cst = arith.constant dense<0.000000e+00> : vector<24x128xf32>
    %5 = tpu.matmul %3, %4, %cst {dimension_numbers = #tpu.dot_dimension_numbers<[1], [1], [0], [0], [0, 0, 1, 0], [], []>} : vector<24x32xbf16>, vector<128x32xbf16>, vector<24x128xf32> -> vector<24x128xf32>
    %c128_i32 = arith.constant 128 : i32
    %6 = arith.muli %arg1, %c128_i32 : i32
    %7 = tpu.iota {dimensions = array<i32: 1>} : vector<24x128xi32>
    %8 = vector.broadcast %6 : i32 to vector<24x128xi32>
    %9 = arith.addi %8, %7 : vector<24x128xi32>
    %c0_4 = arith.constant 0 : index
    %c0_5 = arith.constant 0 : index
    %10 = vector.load %arg4[%c0_4, %c0_5] : memref<24x1xi32, #tpu.memory_space<vmem>>, vector<24x1xi32>
    %c0_6 = arith.constant 0 : index
    %c0_7 = arith.constant 0 : index
    %11 = vector.load %arg5[%c0_6, %c0_7] : memref<24x1xi32, #tpu.memory_space<vmem>>, vector<24x1xi32>
    %12 = vector.broadcast %11 : vector<24x1xi32> to vector<24x128xi32>
    %13 = arith.cmpi eq, %9, %12 : vector<24x128xi32>
    %14 = vector.broadcast %10 : vector<24x1xi32> to vector<24x128xi32>
    %15 = arith.cmpi eq, %9, %14 : vector<24x128xi32>
    %c8_i32 = arith.constant 8 : i32
    %16 = vector.broadcast %c8_i32 : i32 to vector<24x128xi32>
    %17 = arith.cmpi sge, %9, %16 : vector<24x128xi32>
    %18 = arith.ori %15, %17 : vector<24x128xi1>
    %cst_8 = arith.constant 0xFF800000 : f32
    %19 = vector.broadcast %cst_8 : f32 to vector<24x128xf32>
    %20 = arith.select %18, %19, %5 : vector<24x128xi1>, vector<24x128xf32>
    %cst_9 = arith.constant 1.000000e+01 : f32
    %21 = vector.broadcast %cst_9 : f32 to vector<24x128xf32>
    %22 = arith.mulf %20, %21 : vector<24x128xf32>
    %c0_10 = arith.constant 0 : index
    %c0_11 = arith.constant 0 : index
    %23 = vector.load %arg8[%c0_10, %c0_11] : memref<24x1xf32, #tpu.memory_space<vmem>>, vector<24x1xf32>
    %cst_12 = arith.constant dense<0xFF800000> : vector<24xf32>
    %24 = vector.multi_reduction <maximumf>, %22, %cst_12 [1] : vector<24x128xf32> to vector<24xf32>
    %25 = vector.shape_cast %24 : vector<24xf32> to vector<24x1xf32>
    %26 = arith.maximumf %23, %25 : vector<24x1xf32>
    %27 = arith.subf %23, %26 : vector<24x1xf32>
    %28 = math.exp %27 : vector<24x1xf32>
    %c0_13 = arith.constant 0 : index
    %c0_14 = arith.constant 0 : index
    %29 = vector.load %arg9[%c0_13, %c0_14] : memref<24x1xf32, #tpu.memory_space<vmem>>, vector<24x1xf32>
    %30 = arith.mulf %28, %29 : vector<24x1xf32>
    %31 = vector.broadcast %26 : vector<24x1xf32> to vector<24x128xf32>
    %32 = arith.subf %22, %31 : vector<24x128xf32>
    %33 = math.exp %32 : vector<24x128xf32>
    %cst_15 = arith.constant dense<0.000000e+00> : vector<24xf32>
    %34 = vector.multi_reduction <add>, %33, %cst_15 [1] : vector<24x128xf32> to vector<24xf32>
    %35 = vector.shape_cast %34 : vector<24xf32> to vector<24x1xf32>
    %36 = arith.addf %30, %35 : vector<24x1xf32>
    %c0_16 = arith.constant 0 : index
    %c0_17 = arith.constant 0 : index
    %37 = vector.load %arg9[%c0_16, %c0_17] : memref<24x1xf32, #tpu.memory_space<vmem>>, vector<24x1xf32>
    tpu.vector_store %arg9[%c0_16, %c0_17], %36 {strides = array<i32>} : memref<24x1xf32, #tpu.memory_space<vmem>>, vector<24x1xf32>,
    %c0_18 = arith.constant 0 : index
    %c0_19 = arith.constant 0 : index
    %38 = vector.load %arg10[%c0_18, %c0_19] : memref<24x1xf32, #tpu.memory_space<vmem>>, vector<24x1xf32>
    %cst_20 = arith.constant 0.000000e+00 : f32
    %39 = vector.broadcast %cst_20 : f32 to vector<24x128xf32>
    %40 = arith.select %13, %22, %39 : vector<24x128xi1>, vector<24x128xf32>
    %cst_21 = arith.constant dense<0.000000e+00> : vector<24xf32>
    %41 = vector.multi_reduction <add>, %40, %cst_21 [1] : vector<24x128xf32> to vector<24xf32>
    %42 = vector.shape_cast %41 : vector<24xf32> to vector<24x1xf32>
    %43 = arith.addf %38, %42 : vector<24x1xf32>
    %c0_22 = arith.constant 0 : index
    %c0_23 = arith.constant 0 : index
    %44 = vector.load %arg10[%c0_22, %c0_23] : memref<24x1xf32, #tpu.memory_space<vmem>>, vector<24x1xf32>
    tpu.vector_store %arg10[%c0_22, %c0_23], %43 {strides = array<i32>} : memref<24x1xf32, #tpu.memory_space<vmem>>, vector<24x1xf32>,
    %c0_24 = arith.constant 0 : index
    %c0_25 = arith.constant 0 : index
    %45 = vector.load %arg8[%c0_24, %c0_25] : memref<24x1xf32, #tpu.memory_space<vmem>>, vector<24x1xf32>
    tpu.vector_store %arg8[%c0_24, %c0_25], %26 {strides = array<i32>} : memref<24x1xf32, #tpu.memory_space<vmem>>, vector<24x1xf32>,
    %c0_i32_26 = arith.constant 0 : i32
    %46 = arith.cmpi eq, %arg1, %c0_i32_26 : i32
    %47 = arith.extui %46 : i1 to i32
    %c0_i32_27 = arith.constant 0 : i32
    %48 = arith.cmpi ne, %47, %c0_i32_27 : i32
    scf.if %48 {
      %c24_i32 = arith.constant 24 : i32
      %49 = arith.muli %arg0, %c24_i32 : i32
      %50 = tpu.iota {dimensions = array<i32: 0>} : vector<24x1xi32>
      %51 = vector.broadcast %49 : i32 to vector<24x1xi32>
      %52 = arith.addi %51, %50 : vector<24x1xi32>
      %c24_i32_28 = arith.constant 24 : i32
      %53 = vector.broadcast %c24_i32_28 : i32 to vector<24x1xi32>
      %54 = arith.cmpi slt, %52, %53 : vector<24x1xi32>
      %55 = arith.extui %54 : vector<24x1xi1> to vector<24x1xi32>
      %56 = arith.sitofp %55 : vector<24x1xi32> to vector<24x1xf32>
      %c0_29 = arith.constant 0 : index
      %c0_30 = arith.constant 0 : index
      %57 = vector.load %arg8[%c0_29, %c0_30] : memref<24x1xf32, #tpu.memory_space<vmem>>, vector<24x1xf32>
      %c0_31 = arith.constant 0 : index
      %c0_32 = arith.constant 0 : index
      %58 = vector.load %arg9[%c0_31, %c0_32] : memref<24x1xf32, #tpu.memory_space<vmem>>, vector<24x1xf32>
      %59 = math.log %58 : vector<24x1xf32>
      %60 = arith.addf %57, %59 : vector<24x1xf32>
      %c0_33 = arith.constant 0 : index
      %c0_34 = arith.constant 0 : index
      %61 = vector.load %arg10[%c0_33, %c0_34] : memref<24x1xf32, #tpu.memory_space<vmem>>, vector<24x1xf32>
      %62 = arith.subf %60, %61 : vector<24x1xf32>
      %63 = arith.mulf %62, %56 : vector<24x1xf32>
      %c0_35 = arith.constant 0 : index
      %c0_36 = arith.constant 0 : index
      %64 = vector.load %arg7[%c0_35, %c0_36] : memref<24x1xf32, #tpu.memory_space<vmem>>, vector<24x1xf32>
      tpu.vector_store %arg7[%c0_35, %c0_36], %63 {strides = array<i32>} : memref<24x1xf32, #tpu.memory_space<vmem>>, vector<24x1xf32>,
    } else {
    }
    return
  }
  func.func @transform_0(%arg0: i32, %arg1: i32) -> (i32, i32) {
    %c0_i32 = arith.constant 0 : i32
    %c0_i32_0 = arith.constant 0 : i32
    return %arg0, %c0_i32 : i32, i32
  }
  func.func @transform_1(%arg0: i32, %arg1: i32) -> (i32, i32) {
    %c0_i32 = arith.constant 0 : i32
    %c0_i32_0 = arith.constant 0 : i32
    return %arg1, %c0_i32 : i32, i32
  }
  func.func @transform_2(%arg0: i32, %arg1: i32) -> (i32, i32) {
    %c0_i32 = arith.constant 0 : i32
    %c0_i32_0 = arith.constant 0 : i32
    return %arg0, %c0_i32 : i32, i32
  }
  func.func @transform_3(%arg0: i32, %arg1: i32) -> (i32, i32) {
    %c0_i32 = arith.constant 0 : i32
    %c0_i32_0 = arith.constant 0 : i32
    return %arg0, %c0_i32 : i32, i32
  }
  func.func @transform_4(%arg0: i32, %arg1: i32) -> (i32, i32) {
    %c0_i32 = arith.constant 0 : i32
    %c0_i32_0 = arith.constant 0 : i32
    return %arg0, %c0_i32 : i32, i32
  }
  func.func @transform_5(%arg0: i32, %arg1: i32) -> (i32, i32) {
    %c0_i32 = arith.constant 0 : i32
    %c0_i32_0 = arith.constant 0 : i32
    return %arg0, %c0_i32 : i32, i32
  }
}

</mosaic_0001>

<llo_original>
// kernel: tpu_custom_call.1
$region0: #{tpu_custom_call.1}
  #allocation0 [shape = 'u32[]', space=smem, size = 0x4, offset = 0x4, fixed_abs, tag = 'smem constant byte address 0x4 - core index']
  #allocation1 [shape = 'u32[144,128]{1,0:T(1,128)}', space=vmem, size = 0x12000, scoped, tag = 'internal scratch']
  #allocation2 [shape = 'f32[24,1]{1,0:T(8,128)}', space=vmem, size = 0x3000, scoped, tag = 'scratch operand']
  #allocation3 [shape = 'f32[24,1]{1,0:T(8,128)}', space=vmem, size = 0x3000, scoped, tag = 'scratch operand']
  #allocation4 [shape = 'f32[24,1]{1,0:T(8,128)}', space=vmem, size = 0x3000, scoped, tag = 'scratch operand']
  %s0 = inlined_call_operand.vmem [shape: bf16[24,32], index: 0, kind: input, shape index: {}]
  %s1 = inlined_call_operand.vmem [shape: bf16[128,32], index: 1, kind: input, shape index: {}]
  %s2 = inlined_call_operand.vmem [shape: s32[24,1], index: 2, kind: input, shape index: {}]
  %s3 = inlined_call_operand.vmem [shape: s32[24,1], index: 3, kind: input, shape index: {}]
  %s4 = inlined_call_operand.vmem [shape: f32[24,1], index: 4, kind: input, shape index: {}]
  %s5 = inlined_call_operand.vmem [shape: f32[24,1], index: 5, kind: output, shape index: {}]
  %s6 = sld [smem:[#allocation0]]
  $region38: #{tpu_custom_call.1} parent=0
    _
  %s8 = ssub.s32 1, %s6
  %s9 = scalar_select 0, %s8, %s6
  // Predicated region
  $region2: #{tpu_custom_call.1} parent=0 // pred_check
    _
  $region3: #{tpu_custom_call.1} parent=0 // pred_check_branch
    %11 = sbr.rel (0) target = $region5
  $region4: #{tpu_custom_call.1} parent=0 // pred_region
    _
  $region5: #{tpu_custom_call.1} parent=0 // pred_fallthru
    _
  // Predicated region
  $region6: #{tpu_custom_call.1} parent=0 // pred_check
    _
  $region7: #{tpu_custom_call.1} parent=0 // pred_check_branch
    %13 = sbr.rel (0) target = $region9
  $region8: #{tpu_custom_call.1} parent=0 // pred_region
    _
  $region9: #{tpu_custom_call.1} parent=0 // pred_fallthru
    _
  // Predicated region
  $region10: #{tpu_custom_call.1} parent=0 // pred_check
    _
  $region11: #{tpu_custom_call.1} parent=0 // pred_check_branch
    %15 = sbr.rel (0) target = $region13
  $region12: #{tpu_custom_call.1} parent=0 // pred_region
    _
  $region13: #{tpu_custom_call.1} parent=0 // pred_fallthru
    _
  // Predicated region
  $region14: #{tpu_custom_call.1} parent=0 // pred_check
    _
  $region15: #{tpu_custom_call.1} parent=0 // pred_check_branch
    %17 = sbr.rel (0) target = $region17
  $region16: #{tpu_custom_call.1} parent=0 // pred_region
    _
  $region17: #{tpu_custom_call.1} parent=0 // pred_fallthru
    _
  // Predicated region
  $region18: #{tpu_custom_call.1} parent=0 // pred_check
    _
  $region19: #{tpu_custom_call.1} parent=0 // pred_check_branch
    %19 = sbr.rel (0) target = $region21
  $region20: #{tpu_custom_call.1} parent=0 // pred_region
    _
  $region21: #{tpu_custom_call.1} parent=0 // pred_fallthru
    _
  %p21 = scmp.eq.s32.totalorder 0, 0
  // Predicated region
  $region22: #{tpu_custom_call.1} parent=0 // pred_check
    %p22 = pneg %p21
  $region23: #{tpu_custom_call.1} parent=0 // pred_check_branch
    %24 = sbr.rel (%p22) target = $region25
  $region24: #{tpu_custom_call.1} parent=0 // pred_region
    %vm25 = vcmask 7168
    %26 = vst.msk [vmem:[#allocation2] sm:$0xff] %vm25, -1e+30
    %27 = vst.msk [vmem:[#allocation2 + $0x8] sm:$0xff] %vm25, -1e+30
    %28 = vst.msk [vmem:[#allocation2 + $0x10] sm:$0xff] %vm25, -1e+30
    %29 = vst.msk [vmem:[#allocation3] sm:$0xff] %vm25, 0.0
    %30 = vst.msk [vmem:[#allocation3 + $0x8] sm:$0xff] %vm25, 0.0
    %31 = vst.msk [vmem:[#allocation3 + $0x10] sm:$0xff] %vm25, 0.0
    %32 = vst.msk [vmem:[#allocation4] sm:$0xff] %vm25, 0.0
    %33 = vst.msk [vmem:[#allocation4 + $0x8] sm:$0xff] %vm25, 0.0
    %34 = vst.msk [vmem:[#allocation4 + $0x10] sm:$0xff] %vm25, 0.0
  $region25: #{tpu_custom_call.1} parent=0 // pred_fallthru
    _
  %v35 = vld [vmem:[%s0] sm:$0xf]
  %v36 = vld [vmem:[%s0 + $0x4] sm:$0xf]
  %v37 = vld [vmem:[%s0 + $0x8] sm:$0xf]
  %v38 = vld [vmem:[%s1] sm:$0xf]
  %v39 = vld [vmem:[%s1 + $0x4] sm:$0xf]
  %v40 = vld [vmem:[%s1 + $0x8] sm:$0xf]
  %v41 = vld [vmem:[%s1 + $0xc] sm:$0xf]
  %v42 = vld [vmem:[%s1 + $0x10] sm:$0xf]
  %v43 = vld [vmem:[%s1 + $0x14] sm:$0xf]
  %v44 = vld [vmem:[%s1 + $0x18] sm:$0xf]
  %v45 = vld [vmem:[%s1 + $0x1c] sm:$0xf]
  %v46 = vld [vmem:[%s1 + $0x20] sm:$0xf]
  %v47 = vld [vmem:[%s1 + $0x24] sm:$0xf]
  %v48 = vld [vmem:[%s1 + $0x28] sm:$0xf]
  %v49 = vld [vmem:[%s1 + $0x2c] sm:$0xf]
  %v50 = vld [vmem:[%s1 + $0x30] sm:$0xf]
  %v51 = vld [vmem:[%s1 + $0x34] sm:$0xf]
  %v52 = vld [vmem:[%s1 + $0x38] sm:$0xf]
  %v53 = vld [vmem:[%s1 + $0x3c] sm:$0xf]
  %v57 = vunpack.c.l.b16 %v35
  %v58 = vunpack.c.l.b16 %v36
  %v59 = vunpack.c.l.b16 %v37
  %v60 = vpack.c.b16 %v58, %v57
  %v61 = vpack.c.b16 %v59, %v59
  %v78 = vunpack.c.l.b16 %v38
  %v79 = vunpack.c.l.b16 %v39
  %v80 = vunpack.c.l.b16 %v40
  %v81 = vunpack.c.l.b16 %v41
  %v82 = vunpack.c.l.b16 %v42
  %v83 = vunpack.c.l.b16 %v43
  %v84 = vunpack.c.l.b16 %v44
  %v85 = vunpack.c.l.b16 %v45
  %v86 = vunpack.c.l.b16 %v46
  %v87 = vunpack.c.l.b16 %v47
  %v88 = vunpack.c.l.b16 %v48
  %v89 = vunpack.c.l.b16 %v49
  %v90 = vunpack.c.l.b16 %v50
  %v91 = vunpack.c.l.b16 %v51
  %v92 = vunpack.c.l.b16 %v52
  %v93 = vunpack.c.l.b16 %v53
  %v94 = vpack.c.b16 %v79, %v78
  %v95 = vpack.c.b16 %v81, %v80
  %v96 = vpack.c.b16 %v83, %v82
  %v97 = vpack.c.b16 %v85, %v84
  %v98 = vpack.c.b16 %v87, %v86
  %v99 = vpack.c.b16 %v89, %v88
  %v100 = vpack.c.b16 %v91, %v90
  %v101 = vpack.c.b16 %v93, %v92
  %vm102 = vcmask 261120
  %v104 = vsel %vm102, %v60, 0
  %v107 = vsel %vm102, %v61, 0
  %v110 = vsel %vm102, %v94, 0
  %v113 = vsel %vm102, %v95, 0
  %v116 = vsel %vm102, %v96, 0
  %v119 = vsel %vm102, %v97, 0
  %v122 = vsel %vm102, %v98, 0
  %v125 = vsel %vm102, %v99, 0
  %v128 = vsel %vm102, %v100, 0
  %v131 = vsel %vm102, %v101, 0
  %133 = vmatprep.subr.bf16.mxu0 0
  %134 = vmatpush1.bf16.xpose.msra.mxu0 %v131
  %135 = vmatprep.subr.bf16.mxu0 0
  %136 = vmatpush1.bf16.xpose.msra.mxu0 %v128
  %137 = vmatprep.subr.bf16.mxu0 0
  %138 = vmatpush1.bf16.xpose.msra.mxu0 %v125
  %139 = vmatprep.subr.bf16.mxu0 0
  %140 = vmatpush1.bf16.xpose.msra.mxu0 %v122
  %141 = vmatprep.subr.bf16.mxu0 0
  %142 = vmatpush1.bf16.xpose.msra.mxu0 %v119
  %143 = vmatprep.subr.bf16.mxu0 0
  %144 = vmatpush1.bf16.xpose.msra.mxu0 %v116
  %145 = vmatprep.subr.bf16.mxu0 0
  %146 = vmatpush1.bf16.xpose.msra.mxu0 %v113
  %147 = vmatprep.subr.bf16.mxu0 0
  %148 = vmatpush1.bf16.xpose.msra.mxu0 %v110
  %149 = vmatprep.subr.bf16.mxu0 0
  %150 = vmatpush2.bf16.xpose.msra.mxu0 0
  %151 = vmatprep.subr.bf16.mxu0 0
  %152 = vmatpush2.bf16.xpose.msra.mxu0 0
  %153 = vmatprep.subr.bf16.mxu0 0
  %154 = vmatpush2.bf16.xpose.msra.mxu0 0
  %155 = vmatprep.subr.bf16.mxu0 0
  %156 = vmatpush2.bf16.xpose.msra.mxu0 0
  %157 = vmatprep.subr.bf16.mxu0 0
  %158 = vmatpush2.bf16.xpose.msra.mxu0 0
  %159 = vmatprep.subr.bf16.mxu0 0
  %160 = vmatpush2.bf16.xpose.msra.mxu0 0
  %161 = vmatprep.subr.bf16.mxu0 0
  %162 = vmatpush2.bf16.xpose.msra.mxu0 0
  %163 = vmatprep.subr.bf16.mxu0 0
  %164 = vmatpush2.bf16.xpose.msra.mxu0 0
  %165 = vmatprep.mubr.bf16.mxu0 0
  %166 = vmatmul.mubr.bf16.gmra.mxu0 %v104
  %v167 = vpop.f32.mrf.mxu0
  %v168 = vadd.f32 0.0, %v167
  %v169 = vpop.f32.mrf.mxu0
  %v170 = vpop.f32.mrf.mxu0
  %v171 = vadd.f32 0.0, %v170
  %v172 = vpop.f32.mrf.mxu0
  %173 = vmatprep.mubr.bf16.mxu0 0
  %174 = vmatmul.mubr.bf16.gmra.mxu0 %v107
  %v175 = vpop.f32.mrf.mxu0
  %v176 = vadd.f32 0.0, %v175
  %v177 = vpop.f32.mrf.mxu0
  %v178 = vpop.f32.mrf.mxu0
  %v179 = vpop.f32.mrf.mxu0
  %180 = vdwg.mxu0
  %s181 = smul.u32 0, 128
  %v182 = vlaneseq
  %v183 = vand.u32 %v182, 127
  %v184 = vstv %s181
  %v185 = vadd.s32 %v184, %v183
  %v186 = vld [vmem:[%s2] sm:$0xff]
  %v187 = vld [vmem:[%s2 + $0x8] sm:$0xff]
  %v188 = vld [vmem:[%s2 + $0x10] sm:$0xff]
  %v189 = vld [vmem:[%s3] sm:$0xff]
  %v190 = vld [vmem:[%s3 + $0x8] sm:$0xff]
  %v191 = vld [vmem:[%s3 + $0x10] sm:$0xff]
  %192 = vset.pattern.permute.xlu0 0
  %193 = vperm.xlu0 %192, %v189
  %v194 = vpop.permute.xlu0 %193
  %195 = vset.pattern.permute.xlu0 0
  %196 = vperm.xlu0 %195, %v190
  %v197 = vpop.permute.xlu0 %196
  %198 = vset.pattern.permute.xlu0 0
  %199 = vperm.xlu0 %198, %v191
  %v200 = vpop.permute.xlu0 %199
  %vm201 = vcmp.eq.s32.totalorder %v185, %v194
  %vm202 = vcmp.eq.s32.totalorder %v185, %v197
  %vm203 = vcmp.eq.s32.totalorder %v185, %v200
  %204 = vset.pattern.permute.xlu0 0
  %205 = vperm.xlu0 %204, %v186
  %v206 = vpop.permute.xlu0 %205
  %207 = vset.pattern.permute.xlu0 0
  %208 = vperm.xlu0 %207, %v187
  %v209 = vpop.permute.xlu0 %208
  %210 = vset.pattern.permute.xlu0 0
  %211 = vperm.xlu0 %210, %v188
  %v212 = vpop.permute.xlu0 %211
  %vm213 = vcmp.eq.s32.totalorder %v185, %v206
  %vm214 = vcmp.eq.s32.totalorder %v185, %v209
  %vm215 = vcmp.eq.s32.totalorder %v185, %v212
  %vm216 = vcmp.ge.s32.totalorder %v185, 8
  %vm217 = vmor %vm213, %vm216
  %vm218 = vmor %vm214, %vm216
  %vm219 = vmor %vm215, %vm216
  %v220 = vsel %vm217, -inf, %v168
  %v221 = vsel %vm218, -inf, %v171
  %v222 = vsel %vm219, -inf, %v176
  %v223 = vmul.f32 %v220, 10.0
  %v224 = vmul.f32 %v221, 10.0
  %v225 = vmul.f32 %v222, 10.0
  %v226 = vld [vmem:[#allocation2] sm:$0xff]
  %v227 = vld [vmem:[#allocation2 + $0x8] sm:$0xff]
  %v228 = vld [vmem:[#allocation2 + $0x10] sm:$0xff]
  %229 = vmax.xlane.f32.xlu0 %v223
  %v230 = vpop.xlane.xlu0 %229
  %231 = vmax.xlane.f32.xlu0 %v224
  %v232 = vpop.xlane.xlu0 %231
  %233 = vmax.xlane.f32.xlu0 %v225
  %v234 = vpop.xlane.xlu0 %233
  %v235 = vmax.f32 %v226, %v230
  %v236 = vmax.f32 %v227, %v232
  %v237 = vmax.f32 %v228, %v234
  %v238 = vsub.f32 %v226, %v235
  %v239 = vsub.f32 %v227, %v236
  %v240 = vsub.f32 %v228, %v237
  %v241 = vmul.f32 %v238, 1.442695
  %v242 = vpow.pop %v241
  %v243 = vmul.f32 %v239, 1.442695
  %v244 = vpow.pop %v243
  %v245 = vmul.f32 %v240, 1.442695
  %v246 = vpow.pop %v245
  %v247 = vld [vmem:[#allocation3] sm:$0xff]
  %v248 = vld [vmem:[#allocation3 + $0x8] sm:$0xff]
  %v249 = vld [vmem:[#allocation3 + $0x10] sm:$0xff]
  %v250 = vmul.f32 %v242, %v247
  %v251 = vmul.f32 %v244, %v248
  %v252 = vmul.f32 %v246, %v249
  %254 = vset.pattern.permute.xlu0 0
  %255 = vperm.xlu0 %254, %v235
  %v256 = vpop.permute.xlu0 %255
  %259 = vset.pattern.permute.xlu0 0
  %260 = vperm.xlu0 %259, %v236
  %v261 = vpop.permute.xlu0 %260
  %264 = vset.pattern.permute.xlu0 0
  %265 = vperm.xlu0 %264, %v237
  %v266 = vpop.permute.xlu0 %265
  %v268 = vsub.f32 %v223, %v256
  %v269 = vsub.f32 %v224, %v261
  %v270 = vsub.f32 %v225, %v266
  %v271 = vmul.f32 %v268, 1.442695
  %v272 = vpow.pop %v271
  %v273 = vmul.f32 %v269, 1.442695
  %v274 = vpow.pop %v273
  %v275 = vmul.f32 %v270, 1.442695
  %v276 = vpow.pop %v275
  %277 = vadd.xlane.f32.xlu0 %v272
  %v278 = vpop.xlane.xlu0 %277
  %279 = vadd.xlane.f32.xlu0 %v274
  %v280 = vpop.xlane.xlu0 %279
  %281 = vadd.xlane.f32.xlu0 %v276
  %v282 = vpop.xlane.xlu0 %281
  %v283 = vadd.f32 %v250, %v278
  %v284 = vadd.f32 %v251, %v280
  %v285 = vadd.f32 %v252, %v282
  %vm286 = vcmask 7168
  %287 = vst.msk [vmem:[#allocation3] sm:$0xff] %vm286, %v283
  %288 = vst.msk [vmem:[#allocation3 + $0x8] sm:$0xff] %vm286, %v284
  %289 = vst.msk [vmem:[#allocation3 + $0x10] sm:$0xff] %vm286, %v285
  %v290 = vld [vmem:[#allocation4] sm:$0xff]
  %v291 = vld [vmem:[#allocation4 + $0x8] sm:$0xff]
  %v292 = vld [vmem:[#allocation4 + $0x10] sm:$0xff]
  %v293 = vsel %vm201, %v223, 0.0
  %v294 = vsel %vm202, %v224, 0.0
  %v295 = vsel %vm203, %v225, 0.0
  %296 = vadd.xlane.f32.xlu0 %v293
  %v297 = vpop.xlane.xlu0 %296
  %298 = vadd.xlane.f32.xlu0 %v294
  %v299 = vpop.xlane.xlu0 %298
  %300 = vadd.xlane.f32.xlu0 %v295
  %v301 = vpop.xlane.xlu0 %300
  %v302 = vadd.f32 %v290, %v297
  %v303 = vadd.f32 %v291, %v299
  %v304 = vadd.f32 %v292, %v301
  %305 = vst.msk [vmem:[#allocation4] sm:$0xff] %vm286, %v302
  %306 = vst.msk [vmem:[#allocation4 + $0x8] sm:$0xff] %vm286, %v303
  %307 = vst.msk [vmem:[#allocation4 + $0x10] sm:$0xff] %vm286, %v304
  %308 = vst.msk [vmem:[#allocation2] sm:$0xff] %vm286, %v235
  %309 = vst.msk [vmem:[#allocation2 + $0x8] sm:$0xff] %vm286, %v236
  %310 = vst.msk [vmem:[#allocation2 + $0x10] sm:$0xff] %vm286, %v237
  // Predicated region
  $region26: #{tpu_custom_call.1} parent=0 // pred_check
    %p311 = pneg %p21
  $region27: #{tpu_custom_call.1} parent=0 // pred_check_branch
    %313 = sbr.rel (%p311) target = $region29
  $region28: #{tpu_custom_call.1} parent=0 // pred_region
    %s314 = smul.u32 0, 24
    %v315 = vlaneseq
    %v316 = vshrl.u32 %v315, 7
    %v317 = vadd.s32 %v316, 8
    %v318 = vadd.s32 %v316, 16
    %v319 = vstv %s314
    %v320 = vadd.s32 %v319, %v316
    %v321 = vadd.s32 %v319, %v317
    %v322 = vadd.s32 %v319, %v318
    %vm323 = vcmp.lt.s32.totalorder %v320, 24
    %vm324 = vcmp.lt.s32.totalorder %v321, 24
    %vm325 = vcmp.lt.s32.totalorder %v322, 24
    %v326 = vsel %vm323, 1, 0
    %v327 = vsel %vm324, 1, 0
    %v328 = vsel %vm325, 1, 0
    %v329 = vcvt.s32.f32 %v326
    %v330 = vcvt.s32.f32 %v327
    %v331 = vcvt.s32.f32 %v328
    %v332 = vld [vmem:[#allocation2] sm:$0xff]
    %v333 = vld [vmem:[#allocation2 + $0x8] sm:$0xff]
    %v334 = vld [vmem:[#allocation2 + $0x10] sm:$0xff]
    %v335 = vld [vmem:[#allocation3] sm:$0xff]
    %v336 = vld [vmem:[#allocation3 + $0x8] sm:$0xff]
    %v337 = vld [vmem:[#allocation3 + $0x10] sm:$0xff]
    %v338 = vlog2.pop %v335
    %v339 = vmul.f32 %v338, 0.6931472
    %v340 = vlog2.pop %v336
    %v341 = vmul.f32 %v340, 0.6931472
    %v342 = vlog2.pop %v337
    %v343 = vmul.f32 %v342, 0.6931472
    %v344 = vadd.f32 %v332, %v339
    %v345 = vadd.f32 %v333, %v341
    %v346 = vadd.f32 %v334, %v343
    %v347 = vld [vmem:[#allocation4] sm:$0xff]
    %v348 = vld [vmem:[#allocation4 + $0x8] sm:$0xff]
    %v349 = vld [vmem:[#allocation4 + $0x10] sm:$0xff]
    %v350 = vsub.f32 %v344, %v347
    %v351 = vsub.f32 %v345, %v348
    %v352 = vsub.f32 %v346, %v349
    %v353 = vmul.f32 %v350, %v329
    %v354 = vmul.f32 %v351, %v330
    %v355 = vmul.f32 %v352, %v331
    %356 = vst.msk [vmem:[%s5] sm:$0xff] %vm286, %v353
    %357 = vst.msk [vmem:[%s5 + $0x8] sm:$0xff] %vm286, %v354
    %358 = vst.msk [vmem:[%s5 + $0x10] sm:$0xff] %vm286, %v355
  $region29: #{tpu_custom_call.1} parent=0 // pred_fallthru
    _
  // Predicated region
  $region30: #{tpu_custom_call.1} parent=0 // pred_check
    _
  $region31: #{tpu_custom_call.1} parent=0 // pred_check_branch
    %360 = sbr.rel (0) target = $region33
  $region32: #{tpu_custom_call.1} parent=0 // pred_region
    _
  $region33: #{tpu_custom_call.1} parent=0 // pred_fallthru
    _
  // Predicated region
  $region34: #{tpu_custom_call.1} parent=0 // pred_check
    _
  $region35: #{tpu_custom_call.1} parent=0 // pred_check_branch
    %362 = sbr.rel (0) target = $region37
  $region36: #{tpu_custom_call.1} parent=0 // pred_region
    _
  $region37: #{tpu_custom_call.1} parent=0 // pred_fallthru
    _

</llo_original>
